<compile_context>
chip_gen: v7x
topology: tpu7x:2x2x1
jax: 0.10.0
libtpu: 0.0.40
codegen_flags: <defaults>
</compile_context>

<pallas_src>
import math
from functools import partial

import jax
import jax.numpy as jnp
from jax.experimental import pallas as pl
from jax.experimental.pallas import tpu as pltpu


# ----------------------------------------------------------------------------
# Static segment planning (placement of class tokens is a compile-time choice).
# ----------------------------------------------------------------------------
def _chunk_sizes(n, chunks):
    """Replicates torch.chunk size semantics along one dim."""
    size = math.ceil(n / chunks)
    sizes = []
    rem = n
    while rem > 0:
        s = min(size, rem)
        sizes.append(s)
        rem -= s
    return sizes


def _build_segments(seq_len, num_tokens, location):
    """Returns list of (src, src_start, dst_start, length) with src in {'x','tok'}.

    All values are static Python ints."""
    segs = []
    if location == "first":
        segs.append(("tok", 0, 0, num_tokens))
        segs.append(("x", 0, num_tokens, seq_len))
    elif location == "last":
        segs.append(("x", 0, 0, seq_len))
        segs.append(("tok", 0, seq_len, num_tokens))
    elif location == "middle":
        pre = _chunk_sizes(seq_len, 2)[0]
        post = seq_len - pre
        segs.append(("x", 0, 0, pre))
        segs.append(("tok", 0, pre, num_tokens))
        segs.append(("x", pre, pre + num_tokens, post))
    elif location == "bilateral":
        assert num_tokens % 2 == 0
        half = num_tokens // 2
        segs.append(("tok", 0, 0, half))
        segs.append(("x", 0, half, seq_len))
        segs.append(("tok", half, half + seq_len, half))
    elif location == "uniform":
        sizes = _chunk_sizes(seq_len, num_tokens + 1)
        assert len(sizes) == num_tokens + 1, "not enough chunks for uniform placement"
        src = 0
        dst = 0
        segs.append(("x", src, dst, sizes[0]))
        src += sizes[0]
        dst += sizes[0]
        for i in range(num_tokens):
            segs.append(("tok", i, dst, 1))
            dst += 1
            segs.append(("x", src, dst, sizes[i + 1]))
            src += sizes[i + 1]
            dst += sizes[i + 1]
    else:
        raise NotImplementedError(location)
    return segs


# ----------------------------------------------------------------------------
# Kernel: pure VMEM copies with static slice bounds.
# ----------------------------------------------------------------------------
def _class_tokens_kernel(tok_ref, x_ref, o_ref, *, segments):
    # tok_ref: (1, T, D)   x_ref: (TB, S, D)   o_ref: (TB, S+T, D)
    tb = o_ref.shape[0]
    for src, s0, d0, ln in segments:
        if src == "x":
            # Single bulk assignment per x segment -> plain full-width stores
            # (only statically sublane-shifted when the tokens offset dst).
            o_ref[:, d0:d0 + ln, :] = x_ref[:, s0:s0 + ln, :]
        else:
            tok = tok_ref[:, s0:s0 + ln, :]  # (1, ln, D)
            o_ref[:, d0:d0 + ln, :] = jnp.broadcast_to(
                tok, (tb, ln, tok.shape[2]))


# ----------------------------------------------------------------------------
# VMEM-aware block sizing.
# ----------------------------------------------------------------------------
def _vmem_budgets():
    """Returns (block_budget_bytes, vmem_limit_bytes) for the current chip."""
    try:
        cap = int(pltpu.get_tpu_info().vmem_capacity_bytes)
        if cap <= 0:
            raise ValueError
    except Exception:
        cap = 64 << 20  # conservative: v7x physical VMEM per TensorCore
    block_budget = cap // 2            # double-buffered blocks must fit here
    vmem_limit = min((cap * 3) // 4, 128 << 20)  # raised scoped limit w/ headroom
    return block_budget, vmem_limit


def _pick_batch_block(B, S, T, D, itemsize, block_budget):
    """Batch rows per grid step (TB), VMEM-fitting and load-balanced."""
    # Input and output blocks are each double-buffered by the pipeline.
    per_row = 2 * (S * D + (S + T) * D) * itemsize
    tok_bytes = 2 * T * D * itemsize
    tb_fit = max(1, (block_budget - tok_bytes) // max(per_row, 1))
    tb_fit = int(min(tb_fit, B))
    # Balance: split B into equal-ish blocks instead of max-fit + tiny tail.
    steps = pl.cdiv(B, tb_fit)
    # Keep >= 2 grid steps when possible so both TensorCores on a v7x chip
    # get work (no effect on single-TC v5e/v6e besides slightly smaller DMAs).
    if steps == 1 and B > 1:
        steps = 2
    tb = pl.cdiv(B, steps)
    return int(max(1, tb))


# ----------------------------------------------------------------------------
# Wrapper
# ----------------------------------------------------------------------------
def vit_class_tokens_forward(x, tokens, *, location="first"):
    """x: (B, S, D); tokens: (1, T, D) parameter (or None / T == 0)."""
    if tokens is None or tokens.shape[1] == 0:
        return x
    assert x.ndim == 3, x.shape
    B, S, D = x.shape
    T = tokens.shape[1]
    tokens = tokens.astype(x.dtype)  # match activation dtype (bf16 inference)
    segments = _build_segments(S, T, location)
    out_seq = S + T
    itemsize = jnp.dtype(x.dtype).itemsize

    block_budget, vmem_limit = _vmem_budgets()
    tb = _pick_batch_block(B, S, T, D, itemsize, block_budget)
    grid = (pl.cdiv(B, tb),)

    kernel = partial(_class_tokens_kernel, segments=segments)

    return pl.pallas_call(
        kernel,
        out_shape=jax.ShapeDtypeStruct((B, out_seq, D), x.dtype),
        grid_spec=pltpu.PrefetchScalarGridSpec(
            num_scalar_prefetch=0,
            grid=grid,
            in_specs=[
                pl.BlockSpec((1, T, D), lambda b: (0, 0, 0)),    # tokens (resident)
                pl.BlockSpec((tb, S, D), lambda b: (b, 0, 0)),   # x, TB rows / step
            ],
            out_specs=pl.BlockSpec((tb, out_seq, D), lambda b: (b, 0, 0)),
        ),
        compiler_params=pltpu.CompilerParams(
            dimension_semantics=("parallel",),
            vmem_limit_bytes=int(vmem_limit),
        ),
    )(tokens, x)


# ----------------------------------------------------------------------------
# Pure-JAX reference mirroring the PyTorch module.
# ----------------------------------------------------------------------------
def _reference_forward(x, tokens, location):
    B, S, D = x.shape
    T = tokens.shape[1]
    tok = jnp.broadcast_to(tokens.astype(x.dtype), (B, T, D))
    if location == "first":
        return jnp.concatenate([tok, x], axis=1)
    if location == "last":
        return jnp.concatenate([x, tok], axis=1)
    if location == "middle":
        pre = _chunk_sizes(S, 2)[0]
        return jnp.concatenate([x[:, :pre], tok, x[:, pre:]], axis=1)
    if location == "bilateral":
        half = T // 2
        return jnp.concatenate([tok[:, :half], x, tok[:, half:]], axis=1)
    if location == "uniform":
        sizes = _chunk_sizes(S, T + 1)
        parts = []
        off = 0
        parts.append(x[:, off:off + sizes[0]])
        off += sizes[0]
        for i in range(T):
            parts.append(tok[:, i:i + 1])
            parts.append(x[:, off:off + sizes[i + 1]])
            off += sizes[i + 1]
        return jnp.concatenate(parts, axis=1)
    raise NotImplementedError(location)


if __name__ == "__main__":
    # Module defaults: dim=32, num_tokens=1, location='first', init_std=0.02
    dim = 32
    num_tokens = 1
    location = "first"
    init_std = 0.02

    B, S = 2, 8

    key = jax.random.PRNGKey(0)
    k_tok, k_x = jax.random.split(key)

    # Deterministic parameter init: nn.init.normal_(tokens, std=0.02)
    tokens = init_std * jax.random.normal(k_tok, (1, num_tokens, dim), dtype=jnp.float32)
    x = jax.random.normal(k_x, (B, S, dim), dtype=jnp.float32)

    out = jax.block_until_ready(vit_class_tokens_forward(x, tokens, location=location))
    ref = _reference_forward(x, tokens, location)
    assert out.shape == (B, S + num_tokens, dim), out.shape
    assert out.dtype == x.dtype
    assert jnp.array_equal(out, ref), "mismatch vs reference (first)"

    # Extra coverage: all placements + a realistic bf16 shape with unaligned S.
    extra_cases = [
        # (B, S, D, T, location, dtype)
        (2, 8, 32, 1, "last", jnp.float32),
        (2, 8, 32, 2, "middle", jnp.float32),
        (2, 8, 32, 2, "bilateral", jnp.float32),
        (2, 8, 32, 3, "uniform", jnp.float32),
        (4, 197, 768, 1, "first", jnp.bfloat16),
    ]
    for (b_, s_, d_, t_, loc_, dt_) in extra_cases:
        kt, kx = jax.random.split(jax.random.PRNGKey(1))
        tok_ = (init_std * jax.random.normal(kt, (1, t_, d_), jnp.float32)).astype(dt_)
        x_ = jax.random.normal(kx, (b_, s_, d_), jnp.float32).astype(dt_)
        o_ = jax.block_until_ready(vit_class_tokens_forward(x_, tok_, location=loc_))
        r_ = _reference_forward(x_, tok_, loc_)
        assert o_.shape == (b_, s_ + t_, d_), (loc_, o_.shape)
        assert o_.dtype == x_.dtype, (loc_, o_.dtype)
        assert jnp.array_equal(o_, r_), f"mismatch vs reference ({loc_})"

    print("KERNEL_OK")
</pallas_src>

<mosaic_0001>
module attributes {stable_mosaic.version = 11 : i64} {
  func.func @_class_tokens_kernel(%arg0: i32, %arg1: memref<1x1x32xf32, #tpu.memory_space<vmem>>, %arg2: memref<1x8x32xf32, #tpu.memory_space<vmem>>, %arg3: memref<1x9x32xf32, #tpu.memory_space<vmem>>) attributes {dimension_semantics = [#tpu.dimension_semantics<parallel>], iteration_bounds = array<i64: 2>, scalar_prefetch = 0 : i64, scratch_operands = 0 : i64, tpu.core_type = #tpu.core_type<tc>, window_params = [{pipeline_mode = #tpu.pipeline_mode<synchronous>, transform_indices = @transform_0, window_bounds = array<i64: 1, 1, 32>}, {transform_indices = @transform_1, window_bounds = array<i64: 1, 8, 32>}, {transform_indices = @transform_2, window_bounds = array<i64: 1, 9, 32>}]} {
    %c0 = arith.constant 0 : index
    %c0_0 = arith.constant 0 : index
    %c0_1 = arith.constant 0 : index
    %0 = vector.load %arg1[%c0, %c0_0, %c0_1] : memref<1x1x32xf32, #tpu.memory_space<vmem>>, vector<1x1x32xf32>
    %c0_2 = arith.constant 0 : index
    %c0_3 = arith.constant 0 : index
    %c0_4 = arith.constant 0 : index
    %1 = vector.load %arg3[%c0_2, %c0_3, %c0_4] : memref<1x9x32xf32, #tpu.memory_space<vmem>>, vector<1x1x32xf32>
    tpu.vector_store %arg3[%c0_2, %c0_3, %c0_4], %0 {strides = array<i32>} : memref<1x9x32xf32, #tpu.memory_space<vmem>>, vector<1x1x32xf32>,
    %c0_5 = arith.constant 0 : index
    %c0_6 = arith.constant 0 : index
    %c0_7 = arith.constant 0 : index
    %2 = vector.load %arg2[%c0_5, %c0_6, %c0_7] : memref<1x8x32xf32, #tpu.memory_space<vmem>>, vector<1x8x32xf32>
    %c0_8 = arith.constant 0 : index
    %c1 = arith.constant 1 : index
    %c0_9 = arith.constant 0 : index
    %3 = vector.load %arg3[%c0_8, %c1, %c0_9] : memref<1x9x32xf32, #tpu.memory_space<vmem>>, vector<1x8x32xf32>
    tpu.vector_store %arg3[%c0_8, %c1, %c0_9], %2 {strides = array<i32>} : memref<1x9x32xf32, #tpu.memory_space<vmem>>, vector<1x8x32xf32>,
    return
  }
  func.func @transform_0(%arg0: i32) -> (i32, i32, i32) {
    %c0_i32 = arith.constant 0 : i32
    %c0_i32_0 = arith.constant 0 : i32
    %c0_i32_1 = arith.constant 0 : i32
    %c0_i32_2 = arith.constant 0 : i32
    return %c0_i32, %c0_i32_0, %c0_i32_1 : i32, i32, i32
  }
  func.func @transform_1(%arg0: i32) -> (i32, i32, i32) {
    %c0_i32 = arith.constant 0 : i32
    %c0_i32_0 = arith.constant 0 : i32
    %c0_i32_1 = arith.constant 0 : i32
    return %arg0, %c0_i32, %c0_i32_0 : i32, i32, i32
  }
  func.func @transform_2(%arg0: i32) -> (i32, i32, i32) {
    %c0_i32 = arith.constant 0 : i32
    %c0_i32_0 = arith.constant 0 : i32
    %c0_i32_1 = arith.constant 0 : i32
    return %arg0, %c0_i32, %c0_i32_0 : i32, i32, i32
  }
}

</mosaic_0001>

<llo_original>
// kernel: tpu_custom_call.1
$region0: #{tpu_custom_call.1}
  #allocation0 [shape = 'u32[]', space=smem, size = 0x4, offset = 0x4, fixed_abs, tag = 'smem constant byte address 0x4 - core index']
  #allocation1 [shape = 'u32[144,128]{1,0:T(1,128)}', space=vmem, size = 0x12000, scoped, tag = 'internal scratch']
  %s0 = inlined_call_operand.hbm [shape: f32[1,1,32], index: 0, kind: input, shape index: {}]
  %s1 = inlined_call_operand.hbm [shape: f32[2,8,32], index: 1, kind: input, shape index: {}]
  %s2 = inlined_call_operand.vmem [shape: f32[2,9,32], index: 2, kind: output, shape index: {}]
  %s3 = sld [smem:[#allocation0]]
  $region49: #{tpu_custom_call.1} parent=0
    _
  %s5 = ssub.s32 1, %s3
  %s6 = scalar_select 0, %s5, %s3
  $region1: #{tpu_custom_call.1} parent=0
    #allocation2 [shape = 'u8[512]{0}', space=vmem, size = 0x400, scoped, tag = 'input window, operand 0, single buffered']
    #allocation3 [shape = 's32[2]{0}', space=sflag, size = 0x8, scoped, tag = 'scoped memory for tpu_custom_call.1']
    #allocation4 [shape = 'u8[8192]{0}', space=vmem, size = 0x2000, scoped, tag = 'input window, operand 1']
    #allocation5 [shape = 's32[2]{0}', space=sflag, size = 0x8, scoped, tag = 'scoped memory for tpu_custom_call.1']
    %7 = vsyncpa [#allocation3], 0
    %8 = vsyncpa [#allocation5], 0
    %s9 = scalar_lea.sflag [#allocation5], 1
    %10 = vsyncpa %s9, 0
    loop: start=0, step=1, limit=4
    $region2: #{tpu_custom_call.1} parent=1 // loop_pre_header
      _
    $region3: #{tpu_custom_call.1} parent=1 // loop_header
      %s12 = sphi 0, %s16
      %p13 = scmp.ge.s32.totalorder %s12, 4
      %s20 = sphi 0, %s20
      %s22 = sphi 0, %s20
      %s23 = sphi 0, %s22
      %s37 = sphi 0, %s23
      %s43 = sphi 0, %s45
      %s46 = sphi 0, %s43
      %s47 = sphi 0, %s46
      %s63 = sphi 0, %s47
      %s69 = sphi 0, %s71
      %s72 = sphi 0, %s69
      %s73 = sphi 0, %s72
      %s89 = sphi 0, %s73
    $region4: #{tpu_custom_call.1} parent=1 // loop_header_branch
      %15 = sbr.rel (%p13) target = $region8
    $region5: #{tpu_custom_call.1} parent=1 // loop_body
      %s17 = ssub.s32 %s12, 1
      %s18 = ssub.s32 %s12, 2
      %s19 = sadd.s32 %s12, 1
      %s21 = sadd.s32 %s20, 1
      %p24 = scmp.eq.s32.totalorder %s12, 1
      %p25 = scmp.ne.s32.totalorder %s20, %s22
      %p26 = scmp.eq.s32.totalorder %s12, 0
      %p27 = por %p25, %p26
      %p28 = scmp.ne.s32.totalorder %s20, %s22
      %p29 = scmp.eq.s32.totalorder %s17, 1
      %p30 = por %p28, %p29
      %p31 = scmp.ne.s32.totalorder %s22, %s23
      %p32 = scmp.eq.s32.totalorder %s17, 0
      %p33 = por %p31, %p32
      %p34 = scmp.ne.s32.totalorder %s22, %s23
      %p35 = scmp.eq.s32.totalorder %s18, 1
      %p36 = por %p34, %p35
      %p38 = scmp.ne.s32.totalorder %s23, %s37
      %p39 = scmp.eq.s32.totalorder %s18, 0
      %p40 = por %p38, %p39
      %s41 = ssub.s32 %s12, %s19
      %p42 = scmp.eq.s32.totalorder %s41, 0
      %s44 = sadd.s32 %s43, 1
      %s45 = scalar_select %p42, %s43, %s44
      %p48 = pneg %p42
      %p49 = scmp.eq.s32.totalorder %s12, 1
      %p50 = por %p48, %p49
      %p51 = scmp.ne.s32.totalorder %s43, %s46
      %p52 = scmp.eq.s32.totalorder %s12, 0
      %p53 = por %p51, %p52
      %p54 = scmp.ne.s32.totalorder %s43, %s46
      %p55 = scmp.eq.s32.totalorder %s17, 1
      %p56 = por %p54, %p55
      %p57 = scmp.ne.s32.totalorder %s46, %s47
      %p58 = scmp.eq.s32.totalorder %s17, 0
      %p59 = por %p57, %p58
      %p60 = scmp.ne.s32.totalorder %s46, %s47
      %p61 = scmp.eq.s32.totalorder %s18, 1
      %p62 = por %p60, %p61
      %p64 = scmp.ne.s32.totalorder %s47, %s63
      %p65 = scmp.eq.s32.totalorder %s18, 0
      %p66 = por %p64, %p65
      %s67 = ssub.s32 %s12, %s19
      %p68 = scmp.eq.s32.totalorder %s67, 0
      %s70 = sadd.s32 %s69, 1
      %s71 = scalar_select %p68, %s69, %s70
      %p74 = pneg %p68
      %p75 = scmp.eq.s32.totalorder %s12, 1
      %p76 = por %p74, %p75
      %p77 = scmp.ne.s32.totalorder %s69, %s72
      %p78 = scmp.eq.s32.totalorder %s12, 0
      %p79 = por %p77, %p78
      %p80 = scmp.ne.s32.totalorder %s69, %s72
      %p81 = scmp.eq.s32.totalorder %s17, 1
      %p82 = por %p80, %p81
      %p83 = scmp.ne.s32.totalorder %s72, %s73
      %p84 = scmp.eq.s32.totalorder %s17, 0
      %p85 = por %p83, %p84
      %p86 = scmp.ne.s32.totalorder %s72, %s73
      %p87 = scmp.eq.s32.totalorder %s18, 1
      %p88 = por %p86, %p87
      %p90 = scmp.ne.s32.totalorder %s73, %s89
      %p91 = scmp.eq.s32.totalorder %s18, 0
      %p92 = por %p90, %p91
      %p93 = scmp.le.s32.totalorder 1, %s12
      %p94 = scmp.lt.s32.totalorder %s12, 3
      %p95 = pnand %p93, %p94
      %p96 = pneg %p95
      // Predicated region
      $region9: #{tpu_custom_call.1} parent=5 // pred_check
        _
      $region10: #{tpu_custom_call.1} parent=5 // pred_check_branch
        %98 = sbr.rel (%p95) target = $region12
      $region11: #{tpu_custom_call.1} parent=5 // pred_region
        %s99 = ssub.s32 %s12, 1
        // Predicated region
        $region13: #{tpu_custom_call.1} parent=11 // pred_check
          %p100 = pneg %p33
        $region14: #{tpu_custom_call.1} parent=11 // pred_check_branch
          %102 = sbr.rel (%p100) target = $region16
        $region15: #{tpu_custom_call.1} parent=11 // pred_region
          %s104 = ssub.s32 16, 16
          %105 = vsyncadd [#allocation3], %s104
          %s107 = sshll.u32 [#allocation2], 4
          %s108 = int_to_ptr.vmem [resolvable:$true] %s107
          %110 = dma.hbm_to_vmem [thread:$0]  %s0, 16, %s108, [#allocation3]
        $region16: #{tpu_custom_call.1} parent=11 // pred_fallthru
          _
      $region12: #{tpu_custom_call.1} parent=5 // pred_fallthru
        _
      %p111 = scmp.lt.s32.totalorder %s12, 2
      // Predicated region
      $region17: #{tpu_custom_call.1} parent=5 // pred_check
        %p112 = pneg %p111
      $region18: #{tpu_custom_call.1} parent=5 // pred_check_branch
        %114 = sbr.rel (%p112) target = $region20
      $region19: #{tpu_custom_call.1} parent=5 // pred_region
        // Predicated region
        $region21: #{tpu_custom_call.1} parent=19 // pred_check
          %p115 = pneg %p53
        $region22: #{tpu_custom_call.1} parent=19 // pred_check_branch
          %117 = sbr.rel (%p115) target = $region24
        $region23: #{tpu_custom_call.1} parent=19 // pred_region
          %s118 = sand.u32 %s43, 1
          %s119 = scalar_lea.sflag [#allocation5], %s118
          %s120 = sand.u32 %s43, 1
          %s121 = smul.addr %s120, 8
          %s122 = scalar_lea.vmem [#allocation4], %s121
          %s124 = ssub.s32 128, 128
          %125 = vsyncadd %s119, %s124
          %s126 = smul.addr %s12, 128
          %s127 = scalar_lea.hbm %s1, %s126
          %s129 = sshll.u32 %s122, 4
          %s130 = int_to_ptr.vmem [resolvable:$true] %s129
          %132 = dma.hbm_to_vmem [thread:$0]  %s127, 128, %s130, %s119
        $region24: #{tpu_custom_call.1} parent=19 // pred_fallthru
          _
      $region20: #{tpu_custom_call.1} parent=5 // pred_fallthru
        _
      %p133 = scmp.le.s32.totalorder 1, %s12
      %p134 = scmp.lt.s32.totalorder %s12, 3
      %p135 = pnand %p133, %p134
      %p136 = pneg %p135
      // Predicated region
      $region25: #{tpu_custom_call.1} parent=5 // pred_check
        _
      $region26: #{tpu_custom_call.1} parent=5 // pred_check_branch
        %138 = sbr.rel (%p135) target = $region28
      $region27: #{tpu_custom_call.1} parent=5 // pred_region
        %s139 = ssub.s32 %s12, 1
        // Predicated region
        $region29: #{tpu_custom_call.1} parent=27 // pred_check
          %p140 = pneg %p33
        $region30: #{tpu_custom_call.1} parent=27 // pred_check_branch
          %142 = sbr.rel (%p140) target = $region32
        $region31: #{tpu_custom_call.1} parent=27 // pred_region
          %143 = dma.done [#allocation3], 16
        $region32: #{tpu_custom_call.1} parent=27 // pred_fallthru
          _
        %s144 = sand.u32 %s46, 1
        %s145 = scalar_lea.sflag [#allocation5], %s144
        %s146 = sand.u32 %s46, 1
        %s147 = smul.addr %s146, 8
        %s148 = scalar_lea.vmem [#allocation4], %s147
        // Predicated region
        $region33: #{tpu_custom_call.1} parent=27 // pred_check
          %p149 = pneg %p59
        $region34: #{tpu_custom_call.1} parent=27 // pred_check_branch
          %151 = sbr.rel (%p149) target = $region36
        $region35: #{tpu_custom_call.1} parent=27 // pred_region
          %152 = dma.done %s145, 128
        $region36: #{tpu_custom_call.1} parent=27 // pred_fallthru
          _
        %p153 = pneg %p33
        %p154 = pneg %p30
        %s155 = sand.u32 %s46, 1
        %s156 = scalar_lea.sflag [#allocation5], %s155
        %s157 = sand.u32 %s46, 1
        %s158 = smul.addr %s157, 8
        %s159 = scalar_lea.vmem [#allocation4], %s158
        %p160 = pneg %p59
        %p161 = pneg %p56
        %p162 = pneg %p85
        %p163 = pneg %p82
        %p164 = scmp.lt.s32.totalorder %s17, 1
        %s165 = scalar_select %p164, %s17, 1
        %s166 = smul.addr %s165, 2
        %s167 = smul.addr %s166, 8
        %s168 = scalar_lea.vmem %s2, %s167
        %p169 = scmp.lt.s32.totalorder %s17, 1
        %s170 = scalar_select %p169, %s17, 1
        %s171 = smul.addr %s170, 2
        %s172 = smul.addr %s171, 8
        %s173 = scalar_lea.vmem %s2, %s172
        %v174 = vld [vmem:[#allocation2] sm:$0x1]
        %vm175 = vcmask 253952
        %176 = vst.msk [vmem:[%s173] sm:$0x1] %vm175, %v174
        %v177 = vld [vmem:[%s148] sm:$0xff]
        %vm178 = vcmask 261120
        %179 = vst.msk [vmem:[%s173 + $0x1] sm:$0xff] %vm178, %v177
        %p180 = scmp.lt.s32.totalorder %s17, 1
        %s181 = scalar_select %p180, %s17, 1
        %s182 = smul.addr %s181, 2
        %s183 = smul.addr %s182, 8
        %s184 = scalar_lea.vmem %s2, %s183
        // Predicated region
        $region37: #{tpu_custom_call.1} parent=27 // pred_check
          %p185 = pneg %p82
        $region38: #{tpu_custom_call.1} parent=27 // pred_check_branch
          %187 = sbr.rel (%p185) target = $region40
        $region39: #{tpu_custom_call.1} parent=27 // pred_region
          _
        $region40: #{tpu_custom_call.1} parent=27 // pred_fallthru
          _
      $region28: #{tpu_custom_call.1} parent=5 // pred_fallthru
        _
      %p188 = scmp.le.s32.totalorder 2, %s12
      // Predicated region
      $region41: #{tpu_custom_call.1} parent=5 // pred_check
        %p189 = pneg %p188
      $region42: #{tpu_custom_call.1} parent=5 // pred_check_branch
        %191 = sbr.rel (%p189) target = $region44
      $region43: #{tpu_custom_call.1} parent=5 // pred_region
        %s192 = ssub.s32 %s12, 2
        // Predicated region
        $region45: #{tpu_custom_call.1} parent=43 // pred_check
          %p193 = pneg %p88
        $region46: #{tpu_custom_call.1} parent=43 // pred_check_branch
          %195 = sbr.rel (%p193) target = $region48
        $region47: #{tpu_custom_call.1} parent=43 // pred_region
          %p196 = scmp.lt.s32.totalorder %s18, 1
          %s197 = scalar_select %p196, %s18, 1
          %s198 = smul.addr %s197, 2
          %s199 = smul.addr %s198, 8
          %s200 = scalar_lea.vmem %s2, %s199
        $region48: #{tpu_custom_call.1} parent=43 // pred_fallthru
          _
      $region44: #{tpu_custom_call.1} parent=5 // pred_fallthru
        _
    $region6: #{tpu_custom_call.1} parent=1 // loop_footer
      %s16 = sadd.s32 1, %s12
    $region7: #{tpu_custom_call.1} parent=1 // loop_footer_branch
      %11 = sbr.rel target = $region3
    $region8: #{tpu_custom_call.1} parent=1 // loop_exit
      _
    %201 = vsyncpa [#allocation3], 1
    %s202 = scalar_lea.sflag [#allocation3], 1
    %203 = vsyncpa %s202, 1
    %204 = vsyncpa [#allocation5], 1
    %s205 = scalar_lea.sflag [#allocation5], 1
    %206 = vsyncpa %s205, 1

</llo_original>
